<compile_context>
chip_gen: v7x
topology: tpu7x:2x2x1
jax: 0.10.0
libtpu: 0.0.40
codegen_flags: <defaults>
</compile_context>

<pallas_src>
import math
import functools

import jax
import jax.numpy as jnp
from jax.experimental import pallas as pl
from jax.experimental.pallas import tpu as pltpu

D_MODEL = 16
MAX_LEN = 5000
DROPOUT_P = 0.1
LANE = 128            # TPU lane width: trailing dim of every slab
MAX_TILE_ROWS = 512   # rows per grid step (512 * 128 * 4B = 256 KiB / stream)


def build_pe_table(max_len: int, d_model: int) -> jnp.ndarray:
    """Deterministic sinusoidal table, same math as the PyTorch __init__."""
    position = jnp.arange(max_len, dtype=jnp.float32)[:, None]            # [L, 1]
    div_term = jnp.exp(
        jnp.arange(0, d_model, 2, dtype=jnp.float32) * (-math.log(10000.0) / d_model)
    )                                                                      # [D/2]
    angles = position * div_term                                           # [L, D/2]
    pe = jnp.zeros((max_len, d_model), dtype=jnp.float32)
    pe = pe.at[:, 0::2].set(jnp.sin(angles))
    pe = pe.at[:, 1::2].set(jnp.cos(angles))
    return pe[:, None, :]                                                  # [L, 1, D]


# ---------------------------------------------------------------------------
# Kernels (operate on lane-dense (tile_rows, 128) slabs).
# ---------------------------------------------------------------------------
def _pe_add_kernel(x_ref, pe_ref, o_ref):
    o_ref[...] = (x_ref[...] + pe_ref[...]).astype(o_ref.dtype)


def _pe_add_dropout_kernel(x_ref, pe_ref, bits_ref, o_ref, *, thresh, scale):
    y = x_ref[...] + pe_ref[...]
    # Inverted dropout: keep iff bits >= thresh (thresh = p * 2^32),
    # scale kept values by 1/(1-p).
    keep = bits_ref[...] >= jnp.uint32(thresh)
    o_ref[...] = jnp.where(keep, y * scale, 0.0).astype(o_ref.dtype)


# ---------------------------------------------------------------------------
# Wrapper
# ---------------------------------------------------------------------------
def positional_encoding_forward(x, pe_table, *, dropout_key=None,
                                p=DROPOUT_P, training=True):
    """x: [seq_len, batch, d_model] -> [seq_len, batch, d_model]."""
    S, B, D = x.shape
    out_dtype = x.dtype
    total = S * B * D

    # Lane-dense flattened layout: (rows, 128) slabs, rows tiled over the grid.
    rows = pl.cdiv(total, LANE)
    tile_rows = min(MAX_TILE_ROWS, ((rows + 7) // 8) * 8)   # multiple of 8
    padded_rows = pl.cdiv(rows, tile_rows) * tile_rows
    padded_total = padded_rows * LANE

    def to_slab(a, dtype):
        flat = a.reshape(total).astype(dtype)
        flat = jnp.pad(flat, (0, padded_total - total))
        return flat.reshape(padded_rows, LANE)

    # Pre-broadcast the PE slice over batch so the kernel sees the same
    # lane-dense slab as x (an (S,1,D) block would pad ~64x in VMEM/vregs).
    pe_full = jnp.broadcast_to(pe_table[:S, 0, :][:, None, :], (S, B, D))

    x_slab = to_slab(x, jnp.float32)
    pe_slab = to_slab(pe_full, jnp.float32)

    grid = (padded_rows // tile_rows,)
    spec = pl.BlockSpec((tile_rows, LANE), lambda i: (i, 0))
    compiler_params = pltpu.CompilerParams(
        dimension_semantics=("parallel",),          # megacore split on v7x
        vmem_limit_bytes=32 * 1024 * 1024,          # safe on v5e/v6e/v7x
    )
    out_shape = jax.ShapeDtypeStruct((padded_rows, LANE), jnp.float32)

    if training and p > 0.0:
        if dropout_key is None:
            dropout_key = jax.random.PRNGKey(0)
        bits = jax.random.bits(dropout_key, (total,), dtype=jnp.uint32)
        bits_slab = jnp.pad(bits, (0, padded_total - total)).reshape(padded_rows, LANE)
        thresh = min(int(round(p * 2.0 ** 32)), 2 ** 32 - 1)
        kernel = functools.partial(_pe_add_dropout_kernel,
                                   thresh=thresh, scale=1.0 / (1.0 - p))
        y_slab = pl.pallas_call(
            kernel,
            out_shape=out_shape,
            grid=grid,
            in_specs=[spec, spec, spec],
            out_specs=spec,
            compiler_params=compiler_params,
        )(x_slab, pe_slab, bits_slab)
    else:
        y_slab = pl.pallas_call(
            _pe_add_kernel,
            out_shape=out_shape,
            grid=grid,
            in_specs=[spec, spec],
            out_specs=spec,
            compiler_params=compiler_params,
        )(x_slab, pe_slab)

    return y_slab.reshape(padded_total)[:total].reshape(S, B, D).astype(out_dtype)


if __name__ == "__main__":
    seq_len, batch, d_model = 8, 2, D_MODEL

    key = jax.random.PRNGKey(0)
    kx, kdrop = jax.random.split(key)
    x = jax.random.normal(kx, (seq_len, batch, d_model), dtype=jnp.float32)

    pe_table = build_pe_table(MAX_LEN, d_model)

    # Eval mode (dropout = identity): check exact semantics x + pe[:S].
    y_eval = positional_encoding_forward(x, pe_table, training=False)
    y_eval = jax.block_until_ready(y_eval)
    ref = x + pe_table[:seq_len]
    assert y_eval.shape == (seq_len, batch, d_model)
    assert jnp.allclose(y_eval, ref, atol=1e-6), "PE add mismatch"

    # Train mode: dropout mask (stochastic, inverted scaling by 1/(1-p)).
    y_train = positional_encoding_forward(x, pe_table, dropout_key=kdrop,
                                          training=True)
    y_train = jax.block_until_ready(y_train)
    assert y_train.shape == (seq_len, batch, d_model)
    # Each output element is either 0 or (x+pe)/(1-p).
    scaled = ref / (1.0 - DROPOUT_P)
    ok = jnp.isclose(y_train, 0.0, atol=1e-6) | jnp.isclose(y_train, scaled, atol=1e-5)
    assert bool(jnp.all(ok)), "dropout output is not {0, (x+pe)/(1-p)}"

    print("KERNEL_OK")
</pallas_src>

<mosaic_0001>
module attributes {stable_mosaic.version = 11 : i64} {
  func.func @_pe_add_kernel(%arg0: i32, %arg1: memref<8x128xf32, #tpu.memory_space<vmem>>, %arg2: memref<8x128xf32, #tpu.memory_space<vmem>>, %arg3: memref<8x128xf32, #tpu.memory_space<vmem>>) attributes {dimension_semantics = [#tpu.dimension_semantics<parallel>], iteration_bounds = array<i64: 1>, scalar_prefetch = 0 : i64, scratch_operands = 0 : i64, tpu.core_type = #tpu.core_type<tc>, window_params = [{transform_indices = @transform_0, window_bounds = array<i64: 8, 128>}, {transform_indices = @transform_1, window_bounds = array<i64: 8, 128>}, {transform_indices = @transform_2, window_bounds = array<i64: 8, 128>}]} {
    %c0 = arith.constant 0 : index
    %c0_0 = arith.constant 0 : index
    %0 = vector.load %arg1[%c0, %c0_0] : memref<8x128xf32, #tpu.memory_space<vmem>>, vector<8x128xf32>
    %c0_1 = arith.constant 0 : index
    %c0_2 = arith.constant 0 : index
    %1 = vector.load %arg2[%c0_1, %c0_2] : memref<8x128xf32, #tpu.memory_space<vmem>>, vector<8x128xf32>
    %2 = arith.addf %0, %1 : vector<8x128xf32>
    %c0_3 = arith.constant 0 : index
    %c0_4 = arith.constant 0 : index
    %3 = vector.load %arg3[%c0_3, %c0_4] : memref<8x128xf32, #tpu.memory_space<vmem>>, vector<8x128xf32>
    tpu.vector_store %arg3[%c0_3, %c0_4], %2 {strides = array<i32>} : memref<8x128xf32, #tpu.memory_space<vmem>>, vector<8x128xf32>,
    return
  }
  func.func @transform_0(%arg0: i32) -> (i32, i32) {
    %c0_i32 = arith.constant 0 : i32
    %c0_i32_0 = arith.constant 0 : i32
    return %arg0, %c0_i32 : i32, i32
  }
  func.func @transform_1(%arg0: i32) -> (i32, i32) {
    %c0_i32 = arith.constant 0 : i32
    %c0_i32_0 = arith.constant 0 : i32
    return %arg0, %c0_i32 : i32, i32
  }
  func.func @transform_2(%arg0: i32) -> (i32, i32) {
    %c0_i32 = arith.constant 0 : i32
    %c0_i32_0 = arith.constant 0 : i32
    return %arg0, %c0_i32 : i32, i32
  }
}

</mosaic_0001>

<llo_original>
// kernel: tpu_custom_call.1
$region0: #{tpu_custom_call.1}
  #allocation0 [shape = 'u32[]', space=smem, size = 0x4, offset = 0x4, fixed_abs, tag = 'smem constant byte address 0x4 - core index']
  #allocation1 [shape = 'u32[144,128]{1,0:T(1,128)}', space=vmem, size = 0x12000, scoped, tag = 'internal scratch']
  %s0 = inlined_call_operand.hbm [shape: f32[8,128], index: 0, kind: input, shape index: {}]
  %s1 = inlined_call_operand.hbm [shape: f32[8,128], index: 1, kind: input, shape index: {}]
  %s2 = inlined_call_operand.hbm [shape: f32[8,128], index: 2, kind: output, shape index: {}]
  %s3 = sld [smem:[#allocation0]]
  $region26: #{tpu_custom_call.1} parent=0
    _
  %s5 = ssub.s32 1, %s3
  %s6 = scalar_select 0, %s5, %s3
  $region1: #{tpu_custom_call.1} parent=0
    #allocation2 [shape = 'u8[4096]{0}', space=vmem, size = 0x1000, scoped, tag = 'input window, operand 0, single buffered']
    #allocation3 [shape = 's32[1]{0}', space=sflag, size = 0x4, scoped, tag = 'scoped memory for tpu_custom_call.1']
    #allocation4 [shape = 's32[1]{0}', space=sflag, size = 0x4, scoped, tag = 'scoped memory for tpu_custom_call.1']
    #allocation5 [shape = 'u8[4096]{0}', space=vmem, size = 0x1000, scoped, tag = 'input window, operand 1, single buffered']
    #allocation6 [shape = 's32[1]{0}', space=sflag, size = 0x4, scoped, tag = 'scoped memory for tpu_custom_call.1']
    #allocation7 [shape = 'u8[4096]{0}', space=vmem, size = 0x1000, scoped, tag = 'output window, operand 0, single buffered']
    %7 = vsyncpa [#allocation3], 0
    %8 = vsyncpa [#allocation6], 0
    %9 = vsyncpa [#allocation4], 0
    // Predicated region
    $region2: #{tpu_custom_call.1} parent=1 // pred_check
      _
    $region3: #{tpu_custom_call.1} parent=1 // pred_check_branch
      %11 = sbr.rel (0) target = $region5
    $region4: #{tpu_custom_call.1} parent=1 // pred_region
      %s13 = ssub.s32 128, 128
      %14 = vsyncadd [#allocation3], %s13
      %s16 = sshll.u32 [#allocation2], 4
      %s17 = int_to_ptr.vmem [resolvable:$true] %s16
      %19 = dma.hbm_to_vmem [thread:$0]  %s0, 128, %s17, [#allocation3]
    $region5: #{tpu_custom_call.1} parent=1 // pred_fallthru
      _
    // Predicated region
    $region6: #{tpu_custom_call.1} parent=1 // pred_check
      _
    $region7: #{tpu_custom_call.1} parent=1 // pred_check_branch
      %21 = sbr.rel (0) target = $region9
    $region8: #{tpu_custom_call.1} parent=1 // pred_region
      %s23 = ssub.s32 128, 128
      %24 = vsyncadd [#allocation6], %s23
      %s26 = sshll.u32 [#allocation5], 4
      %s27 = int_to_ptr.vmem [resolvable:$true] %s26
      %29 = dma.hbm_to_vmem [thread:$0]  %s1, 128, %s27, [#allocation6]
    $region9: #{tpu_custom_call.1} parent=1 // pred_fallthru
      _
    // Predicated region
    $region10: #{tpu_custom_call.1} parent=1 // pred_check
      _
    $region11: #{tpu_custom_call.1} parent=1 // pred_check_branch
      %31 = sbr.rel (0) target = $region13
    $region12: #{tpu_custom_call.1} parent=1 // pred_region
      %32 = dma.done [#allocation3], 128
    $region13: #{tpu_custom_call.1} parent=1 // pred_fallthru
      _
    // Predicated region
    $region14: #{tpu_custom_call.1} parent=1 // pred_check
      _
    $region15: #{tpu_custom_call.1} parent=1 // pred_check_branch
      %34 = sbr.rel (0) target = $region17
    $region16: #{tpu_custom_call.1} parent=1 // pred_region
      %35 = dma.done [#allocation6], 128
    $region17: #{tpu_custom_call.1} parent=1 // pred_fallthru
      _
    %v36 = vld [vmem:[#allocation2] sm:$0xff]
    %v37 = vld [vmem:[#allocation5] sm:$0xff]
    %v38 = vadd.f32 %v36, %v37
    %39 = vst [vmem:[#allocation7] sm:$0xff] %v38
    // Predicated region
    $region18: #{tpu_custom_call.1} parent=1 // pred_check
      _
    $region19: #{tpu_custom_call.1} parent=1 // pred_check_branch
      %41 = sbr.rel (0) target = $region21
    $region20: #{tpu_custom_call.1} parent=1 // pred_region
      %s43 = ssub.s32 128, 128
      %44 = vsyncadd [#allocation4], %s43
      %s46 = sshll.u32 [#allocation7], 4
      %s47 = int_to_ptr.vmem [resolvable:$true] %s46
      %49 = dma.vmem_to_hbm [thread:$0]  %s47, 128, %s2, [#allocation4]
    $region21: #{tpu_custom_call.1} parent=1 // pred_fallthru
      _
    // Predicated region
    $region22: #{tpu_custom_call.1} parent=1 // pred_check
      _
    $region23: #{tpu_custom_call.1} parent=1 // pred_check_branch
      %51 = sbr.rel (0) target = $region25
    $region24: #{tpu_custom_call.1} parent=1 // pred_region
      %52 = dma.done [#allocation4], 128
    $region25: #{tpu_custom_call.1} parent=1 // pred_fallthru
      _
    %53 = vsyncpa [#allocation3], 1
    %54 = vsyncpa [#allocation6], 1
    %55 = vsyncpa [#allocation4], 1

</llo_original>
